<compile_context>
chip_gen: v7x
topology: tpu7x:2x2x1
jax: 0.10.0
libtpu: 0.0.40
codegen_flags: <defaults>
</compile_context>

<pallas_src>
import jax
import jax.numpy as jnp
from jax.experimental import pallas as pl
from jax.experimental.pallas import tpu as pltpu

_LANES = 128
_FUSE_BYTES = 4 * 1024 * 1024     # fuse all sizes into one launch below this


def _tpu_caps():
    """(num_tensorcores, per-pipeline-buffer VMEM budget in bytes)."""
    try:
        kind = jax.devices()[0].device_kind.lower()
    except Exception:  # pragma: no cover - defensive
        kind = ""
    if "v7" in kind:
        # 2 TCs/chip, 64 MiB physical / 32 MiB default-scoped VMEM per TC.
        return 2, 4 << 20          # 4 MiB/buffer -> 16 MiB for 2 inputs x 2 bufs
    if "v5 lite" in kind or "v5e" in kind or "lite" in kind:
        # v5e: 16 MiB default scoped VMEM -> stay conservative (2 MiB/buffer).
        return 1, 2 << 20
    # v6e / default: plenty of VMEM, 4 MiB/buffer is on the roofline plateau.
    return 1, 4 << 20


def _make_msle_kernel(block_rows, steps_per_split, seg_row_starts, seg_counts):
    """seg_row_starts: static per-size starting ROW (multiple-of-128 aligned by
    construction).  seg_counts: static per-size element counts."""
    seg_meta = []
    for row_lo, n in zip(seg_row_starts, seg_counts):
        full_rows = n // _LANES
        tail_lanes = n % _LANES
        seg_meta.append((row_lo, row_lo + full_rows, tail_lanes))
    need_lane = any(t for _, _, t in seg_meta)

    def kernel(yp_ref, yt_ref, sum_ref, cnt_ref):
        c = pl.program_id(0)          # 'parallel' split (megacore-shardable)
        i = pl.program_id(1)          # 'arbitrary' reduction step

        @pl.when(i == 0)
        def _init():
            sum_ref[...] = jnp.zeros_like(sum_ref)
            cnt_ref[...] = jnp.zeros_like(cnt_ref)

        # Upcast in-kernel; inputs stay in their native dtype in HBM.
        yp = yp_ref[...].astype(jnp.float32)
        yt = yt_ref[...].astype(jnp.float32)
        d = jnp.log(yt + 1.0) - jnp.log(yp + 1.0)   # exactly 2 EUP ops/element
        loss = d * d
        finite = jnp.isfinite(loss)
        # Hoisted once per block (not per segment).
        masked_loss = jnp.where(finite, loss, 0.0)
        finite_f32 = finite.astype(jnp.float32)

        # Global ROW index of every sublane of this block.  Uses the *logical*
        # (unclamped) block index, so block overhang / duplicated clamped tail
        # blocks mask to zero.  Only a (block_rows, 1) iota — no full 2D gidx.
        blk = c * steps_per_split + i
        grow = blk * block_rows + jax.lax.broadcasted_iota(
            jnp.int32, (block_rows, 1), 0)
        lane = (jax.lax.broadcasted_iota(jnp.int32, (1, _LANES), 1)
                if need_lane else None)

        sums, cnts = [], []
        for row_lo, full_hi, tail_lanes in seg_meta:   # static -> unrolled
            m = (grow >= row_lo) & (grow < full_hi)    # (block_rows, 1) rows
            if tail_lanes:
                # Partial tail row: mask by exact element count so _as_rows
                # zero-padding never inflates sums or counts.
                m = m | ((grow == full_hi) & (lane < tail_lanes))
            sums.append(jnp.sum(jnp.where(m, masked_loss, 0.0),
                                axis=0, keepdims=True))
            # Per-step per-lane count <= block_rows (exact in f32); accumulated
            # across steps as exact int32.
            cnts.append(jnp.sum(jnp.where(m, finite_f32, 0.0),
                                axis=0, keepdims=True))
        sum_ref[...] += jnp.concatenate(sums, axis=0)[None]
        cnt_ref[...] += jnp.concatenate(cnts, axis=0)[None].astype(jnp.int32)

    return kernel


def _msle_partial_sums(yp2, yt2, seg_row_starts, seg_counts):
    """Run the kernel on (rows, 128) views.

    Returns (sums, counts) of shapes (n_splits, n_seg, 128) f32 / int32; the
    caller does the final (tiny) cross-lane / cross-split reduction in JAX.
    """
    rows = yp2.shape[0]
    n_seg = len(seg_counts)
    itemsize = max(yp2.dtype.itemsize, yt2.dtype.itemsize)

    n_tc, buf_budget = _tpu_caps()
    cap_rows = max(16, buf_budget // (_LANES * itemsize))
    block_rows = min(rows, cap_rows)
    if block_rows < rows:
        # Partial blocks must satisfy the (8,128) tiling (and bf16's (16,128)).
        block_rows = max(16, (block_rows // 16) * 16)
    total_blocks = pl.cdiv(rows, block_rows)

    # Split the reduction across TensorCores only where there are >= 2 of them
    # (v7x).  On single-TC chips (v5e/v6e) a split buys nothing and would add
    # a redundant clamped tail block when total_blocks is odd.
    n_splits = 2 if (n_tc >= 2 and total_blocks >= 2) else 1
    spp = pl.cdiv(total_blocks, n_splits)

    def in_map(c, i):
        # Clamp the physical block index; the kernel masks with the logical
        # index, so clamped (duplicate) tail blocks contribute nothing.
        return (jnp.minimum(c * spp + i, total_blocks - 1), 0)

    def out_map(c, i):
        return (c, 0, 0)

    kernel = _make_msle_kernel(block_rows, spp, seg_row_starts, seg_counts)

    n_elems = rows * _LANES
    in_bytes = n_elems * (yp2.dtype.itemsize + yt2.dtype.itemsize)
    out_bytes = 2 * n_splits * n_seg * _LANES * 8
    cost = pl.CostEstimate(
        flops=8 * n_elems,              # adds/sub/mul/compares/selects per elem
        transcendentals=2 * n_elems,    # two logs per element
        bytes_accessed=in_bytes + out_bytes,
    )

    # 2 pipeline buffers per input + resident outputs + slack.
    vmem_limit = int(
        2 * block_rows * _LANES * (yp2.dtype.itemsize + yt2.dtype.itemsize)
        + 4 * n_splits * n_seg * _LANES * 8
        + (4 << 20))
    vmem_limit = max(vmem_limit, 16 << 20)

    return pl.pallas_call(
        kernel,
        out_shape=(
            jax.ShapeDtypeStruct((n_splits, n_seg, _LANES), jnp.float32),
            jax.ShapeDtypeStruct((n_splits, n_seg, _LANES), jnp.int32),
        ),
        grid_spec=pltpu.PrefetchScalarGridSpec(
            num_scalar_prefetch=0,
            grid=(n_splits, spp),
            in_specs=[
                pl.BlockSpec((block_rows, _LANES), in_map),
                pl.BlockSpec((block_rows, _LANES), in_map),
            ],
            out_specs=[
                pl.BlockSpec((1, n_seg, _LANES), out_map),
                pl.BlockSpec((1, n_seg, _LANES), out_map),
            ],
        ),
        compiler_params=pltpu.CompilerParams(
            dimension_semantics=("parallel", "arbitrary"),
            vmem_limit_bytes=vmem_limit),
        cost_estimate=cost,
    )(yp2, yt2)


def _as_rows(x):
    """Flatten to 1-D and view as (rows, 128).  Pads (a copy) only when the
    element count is not a multiple of 128; padded slots are masked in-kernel
    by the exact per-segment element count."""
    flat = x.reshape(-1)
    n = flat.shape[0]
    rem = n % _LANES
    if rem:
        flat = jnp.pad(flat, (0, _LANES - rem))
    return flat.reshape(-1, _LANES), n


def _sums_per_size_separate(model_output, batch_outputs):
    """One pallas_call per size; no concatenation copy (large-tensor path)."""
    sums, cnts = [], []
    for yp, yt in zip(model_output, batch_outputs):
        yp2, n = _as_rows(yp)
        yt2, n_t = _as_rows(yt)
        assert n == n_t, "y_pred / y_true size mismatch"
        s, c = _msle_partial_sums(yp2, yt2, (0,), (n,))
        sums.append(jnp.sum(s))
        cnts.append(jnp.sum(c))
    return jnp.stack(sums), jnp.stack(cnts)


def _sums_per_size_fused(model_output, batch_outputs):
    """Single pallas_call over the concatenated, row-aligned sizes."""
    yp_rows, yt_rows, row_starts, counts = [], [], [], []
    row_off = 0
    for yp, yt in zip(model_output, batch_outputs):
        yp2, n = _as_rows(yp)
        yt2, n_t = _as_rows(yt)
        assert n == n_t, "y_pred / y_true size mismatch"
        yp_rows.append(yp2)
        yt_rows.append(yt2)
        row_starts.append(row_off)        # static ROW offset of this size
        counts.append(n)
        row_off += yp2.shape[0]
    s, c = _msle_partial_sums(jnp.concatenate(yp_rows, axis=0),
                              jnp.concatenate(yt_rows, axis=0),
                              tuple(row_starts), tuple(counts))
    return jnp.sum(s, axis=(0, 2)), jnp.sum(c, axis=(0, 2))


def msle_loss(model_output, batch_outputs, *, fuse=None):
    """Equivalent of MSLELoss.forward (reduction='mean').  Returns scalar loss."""
    assert len(model_output) == len(batch_outputs)
    if fuse is None:
        total_bytes = sum(int(x.size) * x.dtype.itemsize for x in model_output)
        fuse = total_bytes <= _FUSE_BYTES
    if fuse:
        sums, cnts = _sums_per_size_fused(model_output, batch_outputs)
    else:
        sums, cnts = _sums_per_size_separate(model_output, batch_outputs)
    cnts_f = cnts.astype(jnp.float32)
    # Per-size mean, then count-weighted mean (matches torch).  A size with
    # zero finite entries yields NaN, same as the reference torch module.
    per_size_loss = sums / cnts_f
    return jnp.sum(per_size_loss * cnts_f) / jnp.sum(cnts_f)


def _msle_reference(model_output, batch_outputs):
    """Pure-JAX reference mirroring the torch code (division form)."""
    losses, counts = [], []
    for yp, yt in zip(model_output, batch_outputs):
        l = jnp.log((yt.astype(jnp.float32) + 1.0)
                    / (yp.astype(jnp.float32) + 1.0)) ** 2
        m = jnp.isfinite(l)
        s = jnp.sum(jnp.where(m, l, 0.0))
        c = jnp.sum(m.astype(jnp.float32))
        losses.append(s / c)
        counts.append(c)
    losses = jnp.stack(losses)
    counts = jnp.stack(counts)
    return jnp.sum(losses * counts) / jnp.sum(counts)


if __name__ == "__main__":
    key = jax.random.PRNGKey(0)
    k1, k2, k3, k4 = jax.random.split(key, 4)

    # Two "sizes" in the MultipleSizesBatch, NCHW-shaped tensors.
    yp_a = jnp.abs(jax.random.normal(k1, (2, 4, 16, 16), dtype=jnp.float32))
    yt_a = jnp.abs(jax.random.normal(k2, (2, 4, 16, 16), dtype=jnp.float32))
    yp_b = jnp.abs(jax.random.normal(k3, (2, 4, 8, 8), dtype=jnp.float32))
    yt_b = jnp.abs(jax.random.normal(k4, (2, 4, 8, 8), dtype=jnp.float32))

    # One invalid prediction (y_pred = -1 -> non-finite loss) to exercise the
    # finiteness mask, like the torch module does implicitly.
    yp_a = yp_a.at[0, 0, 0, 0].set(-1.0)

    model_output = [yp_a, yp_b]
    batch_outputs = [yt_a, yt_b]

    ref = _msle_reference(model_output, batch_outputs)

    # Fused single-launch path (auto-selected for small batches like this one).
    loss_fused = msle_loss(model_output, batch_outputs)
    jax.block_until_ready(loss_fused)
    assert jnp.allclose(loss_fused, ref, rtol=1e-4, atol=1e-6), (loss_fused, ref)

    # One-launch-per-size path (used for large tensors); exercised here too.
    loss_split = msle_loss(model_output, batch_outputs, fuse=False)
    jax.block_until_ready(loss_split)
    assert jnp.allclose(loss_split, ref, rtol=1e-4, atol=1e-6), (loss_split, ref)

    # bf16 inputs stay bf16 in HBM; the kernel upcasts in VMEM (halves HBM
    # traffic on this bandwidth-bound kernel).
    model_output_bf16 = [x.astype(jnp.bfloat16) for x in model_output]
    batch_outputs_bf16 = [x.astype(jnp.bfloat16) for x in batch_outputs]
    ref_bf16 = _msle_reference(model_output_bf16, batch_outputs_bf16)
    loss_bf16 = msle_loss(model_output_bf16, batch_outputs_bf16)
    jax.block_until_ready(loss_bf16)
    assert jnp.allclose(loss_bf16, ref_bf16, rtol=2e-3, atol=1e-5), (loss_bf16, ref_bf16)

    print("KERNEL_OK")
</pallas_src>

<mosaic_0001>
module attributes {stable_mosaic.version = 11 : i64} {
  func.func @kernel(%arg0: i32, %arg1: i32, %arg2: memref<20x128xf32, #tpu.memory_space<vmem>>, %arg3: memref<20x128xf32, #tpu.memory_space<vmem>>, %arg4: memref<1x2x128xf32, #tpu.memory_space<vmem>>, %arg5: memref<1x2x128xi32, #tpu.memory_space<vmem>>) attributes {dimension_semantics = [#tpu.dimension_semantics<parallel>, #tpu.dimension_semantics<arbitrary>], iteration_bounds = array<i64: 1, 1>, scalar_prefetch = 0 : i64, scratch_operands = 0 : i64, tpu.core_type = #tpu.core_type<tc>, window_params = [{transform_indices = @transform_0, window_bounds = array<i64: 20, 128>}, {transform_indices = @transform_1, window_bounds = array<i64: 20, 128>}, {transform_indices = @transform_2, window_bounds = array<i64: 1, 2, 128>}, {transform_indices = @transform_3, window_bounds = array<i64: 1, 2, 128>}]} {
    %c0_i32 = arith.constant 0 : i32
    %0 = arith.cmpi eq, %arg1, %c0_i32 : i32
    %1 = arith.extui %0 : i1 to i32
    %c0_i32_0 = arith.constant 0 : i32
    %2 = arith.cmpi ne, %1, %c0_i32_0 : i32
    scf.if %2 {
      %cst_30 = arith.constant 0.000000e+00 : f32
      %70 = vector.broadcast %cst_30 : f32 to vector<1x2x128xf32>
      %c0_31 = arith.constant 0 : index
      %c0_32 = arith.constant 0 : index
      %c0_33 = arith.constant 0 : index
      %71 = vector.load %arg4[%c0_31, %c0_32, %c0_33] : memref<1x2x128xf32, #tpu.memory_space<vmem>>, vector<1x2x128xf32>
      tpu.vector_store %arg4[%c0_31, %c0_32, %c0_33], %70 {strides = array<i32>} : memref<1x2x128xf32, #tpu.memory_space<vmem>>, vector<1x2x128xf32>,
      %c0_i32_34 = arith.constant 0 : i32
      %72 = vector.broadcast %c0_i32_34 : i32 to vector<1x2x128xi32>
      %c0_35 = arith.constant 0 : index
      %c0_36 = arith.constant 0 : index
      %c0_37 = arith.constant 0 : index
      %73 = vector.load %arg5[%c0_35, %c0_36, %c0_37] : memref<1x2x128xi32, #tpu.memory_space<vmem>>, vector<1x2x128xi32>
      tpu.vector_store %arg5[%c0_35, %c0_36, %c0_37], %72 {strides = array<i32>} : memref<1x2x128xi32, #tpu.memory_space<vmem>>, vector<1x2x128xi32>,
    } else {
    }
    %c0 = arith.constant 0 : index
    %c0_1 = arith.constant 0 : index
    %3 = vector.load %arg2[%c0, %c0_1] : memref<20x128xf32, #tpu.memory_space<vmem>>, vector<20x128xf32>
    %c0_2 = arith.constant 0 : index
    %c0_3 = arith.constant 0 : index
    %4 = vector.load %arg3[%c0_2, %c0_3] : memref<20x128xf32, #tpu.memory_space<vmem>>, vector<20x128xf32>
    %cst = arith.constant 1.000000e+00 : f32
    %5 = vector.broadcast %cst : f32 to vector<20x128xf32>
    %6 = arith.addf %4, %5 : vector<20x128xf32>
    %7 = math.log %6 : vector<20x128xf32>
    %cst_4 = arith.constant 1.000000e+00 : f32
    %8 = vector.broadcast %cst_4 : f32 to vector<20x128xf32>
    %9 = arith.addf %3, %8 : vector<20x128xf32>
    %10 = math.log %9 : vector<20x128xf32>
    %11 = arith.subf %7, %10 : vector<20x128xf32>
    %12 = arith.mulf %11, %11 : vector<20x128xf32>
    %13 = tpu.weird %12 : vector<20x128xf32> -> vector<20x128xi1>
    %cst_5 = arith.constant dense<true> : vector<20x128xi1>
    %14 = arith.xori %13, %cst_5 : vector<20x128xi1>
    %cst_6 = arith.constant 0.000000e+00 : f32
    %15 = vector.broadcast %cst_6 : f32 to vector<20x128xf32>
    %16 = arith.select %14, %12, %15 : vector<20x128xi1>, vector<20x128xf32>
    %17 = arith.extui %14 : vector<20x128xi1> to vector<20x128xi32>
    %18 = arith.sitofp %17 : vector<20x128xi32> to vector<20x128xf32>
    %c1_i32 = arith.constant 1 : i32
    %19 = arith.muli %arg0, %c1_i32 : i32
    %20 = arith.addi %19, %arg1 : i32
    %c20_i32 = arith.constant 20 : i32
    %21 = arith.muli %20, %c20_i32 : i32
    %22 = tpu.iota {dimensions = array<i32: 0>} : vector<20x1xi32>
    %23 = vector.broadcast %21 : i32 to vector<20x1xi32>
    %24 = arith.addi %23, %22 : vector<20x1xi32>
    %c0_i32_7 = arith.constant 0 : i32
    %25 = vector.broadcast %c0_i32_7 : i32 to vector<20x1xi32>
    %26 = arith.cmpi sge, %24, %25 : vector<20x1xi32>
    %c16_i32 = arith.constant 16 : i32
    %27 = vector.broadcast %c16_i32 : i32 to vector<20x1xi32>
    %28 = arith.cmpi slt, %24, %27 : vector<20x1xi32>
    %29 = arith.andi %26, %28 : vector<20x1xi1>
    %cst_8 = arith.constant 0.000000e+00 : f32
    %30 = vector.shape_cast %29 : vector<20x1xi1> to vector<20x1xi1>
    %31 = vector.broadcast %30 : vector<20x1xi1> to vector<20x128xi1>
    %32 = vector.broadcast %cst_8 : f32 to vector<20x128xf32>
    %33 = arith.select %31, %16, %32 : vector<20x128xi1>, vector<20x128xf32>
    %cst_9 = arith.constant dense<0.000000e+00> : vector<128xf32>
    %34 = vector.multi_reduction <add>, %33, %cst_9 [0] : vector<20x128xf32> to vector<128xf32>
    %35 = vector.shape_cast %34 : vector<128xf32> to vector<1x128xf32>
    %cst_10 = arith.constant 0.000000e+00 : f32
    %36 = vector.shape_cast %29 : vector<20x1xi1> to vector<20x1xi1>
    %37 = vector.broadcast %36 : vector<20x1xi1> to vector<20x128xi1>
    %38 = vector.broadcast %cst_10 : f32 to vector<20x128xf32>
    %39 = arith.select %37, %18, %38 : vector<20x128xi1>, vector<20x128xf32>
    %cst_11 = arith.constant dense<0.000000e+00> : vector<128xf32>
    %40 = vector.multi_reduction <add>, %39, %cst_11 [0] : vector<20x128xf32> to vector<128xf32>
    %41 = vector.shape_cast %40 : vector<128xf32> to vector<1x128xf32>
    %c16_i32_12 = arith.constant 16 : i32
    %42 = vector.broadcast %c16_i32_12 : i32 to vector<20x1xi32>
    %43 = arith.cmpi sge, %24, %42 : vector<20x1xi32>
    %c20_i32_13 = arith.constant 20 : i32
    %44 = vector.broadcast %c20_i32_13 : i32 to vector<20x1xi32>
    %45 = arith.cmpi slt, %24, %44 : vector<20x1xi32>
    %46 = arith.andi %43, %45 : vector<20x1xi1>
    %cst_14 = arith.constant 0.000000e+00 : f32
    %47 = vector.shape_cast %46 : vector<20x1xi1> to vector<20x1xi1>
    %48 = vector.broadcast %47 : vector<20x1xi1> to vector<20x128xi1>
    %49 = vector.broadcast %cst_14 : f32 to vector<20x128xf32>
    %50 = arith.select %48, %16, %49 : vector<20x128xi1>, vector<20x128xf32>
    %cst_15 = arith.constant dense<0.000000e+00> : vector<128xf32>
    %51 = vector.multi_reduction <add>, %50, %cst_15 [0] : vector<20x128xf32> to vector<128xf32>
    %52 = vector.shape_cast %51 : vector<128xf32> to vector<1x128xf32>
    %cst_16 = arith.constant 0.000000e+00 : f32
    %53 = vector.shape_cast %46 : vector<20x1xi1> to vector<20x1xi1>
    %54 = vector.broadcast %53 : vector<20x1xi1> to vector<20x128xi1>
    %55 = vector.broadcast %cst_16 : f32 to vector<20x128xf32>
    %56 = arith.select %54, %18, %55 : vector<20x128xi1>, vector<20x128xf32>
    %cst_17 = arith.constant dense<0.000000e+00> : vector<128xf32>
    %57 = vector.multi_reduction <add>, %56, %cst_17 [0] : vector<20x128xf32> to vector<128xf32>
    %58 = vector.shape_cast %57 : vector<128xf32> to vector<1x128xf32>
    %c0_18 = arith.constant 0 : index
    %c0_19 = arith.constant 0 : index
    %c0_20 = arith.constant 0 : index
    %59 = vector.load %arg4[%c0_18, %c0_19, %c0_20] : memref<1x2x128xf32, #tpu.memory_space<vmem>>, vector<1x2x128xf32>
    %60 = tpu.concatenate %35, %52 in 0 : vector<1x128xf32>, vector<1x128xf32> -> vector<2x128xf32>
    %61 = vector.shape_cast %60 : vector<2x128xf32> to vector<1x2x128xf32>
    %62 = arith.addf %59, %61 : vector<1x2x128xf32>
    %c0_21 = arith.constant 0 : index
    %c0_22 = arith.constant 0 : index
    %c0_23 = arith.constant 0 : index
    %63 = vector.load %arg4[%c0_21, %c0_22, %c0_23] : memref<1x2x128xf32, #tpu.memory_space<vmem>>, vector<1x2x128xf32>
    tpu.vector_store %arg4[%c0_21, %c0_22, %c0_23], %62 {strides = array<i32>} : memref<1x2x128xf32, #tpu.memory_space<vmem>>, vector<1x2x128xf32>,
    %c0_24 = arith.constant 0 : index
    %c0_25 = arith.constant 0 : index
    %c0_26 = arith.constant 0 : index
    %64 = vector.load %arg5[%c0_24, %c0_25, %c0_26] : memref<1x2x128xi32, #tpu.memory_space<vmem>>, vector<1x2x128xi32>
    %65 = tpu.concatenate %41, %58 in 0 : vector<1x128xf32>, vector<1x128xf32> -> vector<2x128xf32>
    %66 = vector.shape_cast %65 : vector<2x128xf32> to vector<1x2x128xf32>
    %67 = arith.fptosi %66 : vector<1x2x128xf32> to vector<1x2x128xi32>
    %68 = arith.addi %64, %67 : vector<1x2x128xi32>
    %c0_27 = arith.constant 0 : index
    %c0_28 = arith.constant 0 : index
    %c0_29 = arith.constant 0 : index
    %69 = vector.load %arg5[%c0_27, %c0_28, %c0_29] : memref<1x2x128xi32, #tpu.memory_space<vmem>>, vector<1x2x128xi32>
    tpu.vector_store %arg5[%c0_27, %c0_28, %c0_29], %68 {strides = array<i32>} : memref<1x2x128xi32, #tpu.memory_space<vmem>>, vector<1x2x128xi32>,
    return
  }
  func.func @transform_0(%arg0: i32, %arg1: i32) -> (i32, i32) {
    %c1_i32 = arith.constant 1 : i32
    %0 = arith.muli %arg0, %c1_i32 : i32
    %1 = arith.addi %0, %arg1 : i32
    %c0_i32 = arith.constant 0 : i32
    %2 = arith.minsi %1, %c0_i32 : i32
    %c0_i32_0 = arith.constant 0 : i32
    %c0_i32_1 = arith.constant 0 : i32
    return %2, %c0_i32_0 : i32, i32
  }
  func.func @transform_1(%arg0: i32, %arg1: i32) -> (i32, i32) {
    %c1_i32 = arith.constant 1 : i32
    %0 = arith.muli %arg0, %c1_i32 : i32
    %1 = arith.addi %0, %arg1 : i32
    %c0_i32 = arith.constant 0 : i32
    %2 = arith.minsi %1, %c0_i32 : i32
    %c0_i32_0 = arith.constant 0 : i32
    %c0_i32_1 = arith.constant 0 : i32
    return %2, %c0_i32_0 : i32, i32
  }
  func.func @transform_2(%arg0: i32, %arg1: i32) -> (i32, i32, i32) {
    %c0_i32 = arith.constant 0 : i32
    %c0_i32_0 = arith.constant 0 : i32
    %c0_i32_1 = arith.constant 0 : i32
    return %arg0, %c0_i32, %c0_i32_0 : i32, i32, i32
  }
  func.func @transform_3(%arg0: i32, %arg1: i32) -> (i32, i32, i32) {
    %c0_i32 = arith.constant 0 : i32
    %c0_i32_0 = arith.constant 0 : i32
    %c0_i32_1 = arith.constant 0 : i32
    return %arg0, %c0_i32, %c0_i32_0 : i32, i32, i32
  }
}

</mosaic_0001>

<llo_original>
// kernel: tpu_custom_call.1
$region0: #{tpu_custom_call.1}
  #allocation0 [shape = 'u32[]', space=smem, size = 0x4, offset = 0x4, fixed_abs, tag = 'smem constant byte address 0x4 - core index']
  #allocation1 [shape = 'u32[144,128]{1,0:T(1,128)}', space=vmem, size = 0x12000, scoped, tag = 'internal scratch']
  %s0 = inlined_call_operand.hbm [shape: f32[20,128], index: 0, kind: input, shape index: {}]
  %s1 = inlined_call_operand.hbm [shape: f32[20,128], index: 1, kind: input, shape index: {}]
  %s2 = inlined_call_operand.hbm [shape: f32[1,2,128], index: 2, kind: output, shape index: {0}]
  %s3 = inlined_call_operand.hbm [shape: s32[1,2,128], index: 3, kind: output, shape index: {1}]
  %4 = xla_tuple %s2, %s3
  %s5 = sld [smem:[#allocation0]]
  $region38: #{tpu_custom_call.1} parent=0
    _
  %s7 = ssub.s32 1, %s5
  %s8 = scalar_select 0, %s7, %s5
  $region1: #{tpu_custom_call.1} parent=0
    #allocation2 [shape = 'u8[12288]{0}', space=vmem, size = 0x3000, scoped, tag = 'input window, operand 0, single buffered']
    #allocation3 [shape = 's32[1]{0}', space=sflag, size = 0x4, scoped, tag = 'scoped memory for tpu_custom_call.1']
    #allocation4 [shape = 's32[1]{0}', space=sflag, size = 0x4, scoped, tag = 'scoped memory for tpu_custom_call.1']
    #allocation5 [shape = 'u8[12288]{0}', space=vmem, size = 0x3000, scoped, tag = 'input window, operand 1, single buffered']
    #allocation6 [shape = 's32[1]{0}', space=sflag, size = 0x4, scoped, tag = 'scoped memory for tpu_custom_call.1']
    #allocation7 [shape = 'u8[1024]{0}', space=vmem, size = 0x400, scoped, tag = 'output window, operand 0, single buffered']
    #allocation8 [shape = 'u8[1024]{0}', space=vmem, size = 0x400, scoped, tag = 'output window, operand 1, single buffered']
    #allocation9 [shape = 's32[1]{0}', space=sflag, size = 0x4, scoped, tag = 'scoped memory for tpu_custom_call.1']
    %9 = vsyncpa [#allocation3], 0
    %10 = vsyncpa [#allocation6], 0
    %11 = vsyncpa [#allocation4], 0
    %12 = vsyncpa [#allocation9], 0
    // Predicated region
    $region2: #{tpu_custom_call.1} parent=1 // pred_check
      _
    $region3: #{tpu_custom_call.1} parent=1 // pred_check_branch
      %14 = sbr.rel (0) target = $region5
    $region4: #{tpu_custom_call.1} parent=1 // pred_region
      %s15 = sadd.s32 0, 0
      %p16 = scmp.lt.s32.totalorder %s15, 0
      %s17 = scalar_select %p16, %s15, 0
      %s18 = smul.u32 3, %s17
      %s20 = ssub.s32 384, 384
      %21 = vsyncadd [#allocation3], %s20
      %s22 = smul.addr %s18, 128
      %s23 = scalar_lea.hbm %s0, %s22
      %s24 = sshll.u32 [#allocation2], 4
      %s25 = int_to_ptr.vmem [resolvable:$true] %s24
      %30 = dma.hbm_to_vmem [thread:$0]  %s23, 384, %s25, [#allocation3], 128, 128, 8
    $region5: #{tpu_custom_call.1} parent=1 // pred_fallthru
      _
    // Predicated region
    $region6: #{tpu_custom_call.1} parent=1 // pred_check
      _
    $region7: #{tpu_custom_call.1} parent=1 // pred_check_branch
      %32 = sbr.rel (0) target = $region9
    $region8: #{tpu_custom_call.1} parent=1 // pred_region
      %s33 = sadd.s32 0, 0
      %p34 = scmp.lt.s32.totalorder %s33, 0
      %s35 = scalar_select %p34, %s33, 0
      %s36 = smul.u32 3, %s35
      %s38 = ssub.s32 384, 384
      %39 = vsyncadd [#allocation6], %s38
      %s40 = smul.addr %s36, 128
      %s41 = scalar_lea.hbm %s1, %s40
      %s42 = sshll.u32 [#allocation5], 4
      %s43 = int_to_ptr.vmem [resolvable:$true] %s42
      %48 = dma.hbm_to_vmem [thread:$0]  %s41, 384, %s43, [#allocation6], 128, 128, 8
    $region9: #{tpu_custom_call.1} parent=1 // pred_fallthru
      _
    // Predicated region
    $region10: #{tpu_custom_call.1} parent=1 // pred_check
      _
    $region11: #{tpu_custom_call.1} parent=1 // pred_check_branch
      %50 = sbr.rel (0) target = $region13
    $region12: #{tpu_custom_call.1} parent=1 // pred_region
      %51 = dma.done [#allocation3], 384
    $region13: #{tpu_custom_call.1} parent=1 // pred_fallthru
      _
    // Predicated region
    $region14: #{tpu_custom_call.1} parent=1 // pred_check
      _
    $region15: #{tpu_custom_call.1} parent=1 // pred_check_branch
      %53 = sbr.rel (0) target = $region17
    $region16: #{tpu_custom_call.1} parent=1 // pred_region
      %54 = dma.done [#allocation6], 384
    $region17: #{tpu_custom_call.1} parent=1 // pred_fallthru
      _
    %s55 = sadd.s32 0, 0
    %p56 = scmp.lt.s32.totalorder %s55, 0
    %s57 = scalar_select %p56, %s55, 0
    %s58 = smul.u32 3, %s57
    %s59 = sadd.s32 0, 0
    %p60 = scmp.lt.s32.totalorder %s59, 0
    %s61 = scalar_select %p60, %s59, 0
    %s62 = smul.u32 3, %s61
    %p63 = scmp.eq.s32.totalorder 0, 0
    // Predicated region
    $region18: #{tpu_custom_call.1} parent=1 // pred_check
      %p64 = pneg %p63
    $region19: #{tpu_custom_call.1} parent=1 // pred_check_branch
      %66 = sbr.rel (%p64) target = $region21
    $region20: #{tpu_custom_call.1} parent=1 // pred_region
      %67 = vst [vmem:[#allocation7] sm:$0x3] 0.0
      %68 = vst [vmem:[#allocation8] sm:$0x3] 0
    $region21: #{tpu_custom_call.1} parent=1 // pred_fallthru
      _
    %v69 = vld [vmem:[#allocation2] sm:$0xff]
    %v70 = vld [vmem:[#allocation2 + $0x8] sm:$0xff]
    %v71 = vld [vmem:[#allocation2 + $0x10] sm:$0xf]
    %v72 = vld [vmem:[#allocation5] sm:$0xff]
    %v73 = vld [vmem:[#allocation5 + $0x8] sm:$0xff]
    %v74 = vld [vmem:[#allocation5 + $0x10] sm:$0xf]
    %v75 = vadd.f32 %v72, 1.0
    %v76 = vadd.f32 %v73, 1.0
    %v77 = vadd.f32 %v74, 1.0
    %v78 = vlog2.pop %v75
    %v79 = vmul.f32 %v78, 0.6931472
    %v80 = vlog2.pop %v76
    %v81 = vmul.f32 %v80, 0.6931472
    %v82 = vlog2.pop %v77
    %v83 = vmul.f32 %v82, 0.6931472
    %v84 = vadd.f32 %v69, 1.0
    %v85 = vadd.f32 %v70, 1.0
    %v86 = vadd.f32 %v71, 1.0
    %v87 = vlog2.pop %v84
    %v88 = vmul.f32 %v87, 0.6931472
    %v89 = vlog2.pop %v85
    %v90 = vmul.f32 %v89, 0.6931472
    %v91 = vlog2.pop %v86
    %v92 = vmul.f32 %v91, 0.6931472
    %v93 = vsub.f32 %v79, %v88
    %v94 = vsub.f32 %v81, %v90
    %v95 = vsub.f32 %v83, %v92
    %v96 = vmul.f32 %v93, %v93
    %v97 = vmul.f32 %v94, %v94
    %v98 = vmul.f32 %v95, %v95
    %vm99 = vweird.f32 %v96
    %vm100 = vweird.f32 %v97
    %vm101 = vweird.f32 %v98
    %vm102 = vmxor %vm99, 1
    %vm103 = vmxor %vm100, 1
    %vm104 = vmxor %vm101, 1
    %v105 = vsel %vm102, %v96, 0.0
    %v106 = vsel %vm103, %v97, 0.0
    %v107 = vsel %vm104, %v98, 0.0
    %v108 = vsel %vm102, 1, 0
    %v109 = vsel %vm103, 1, 0
    %v110 = vsel %vm104, 1, 0
    %v111 = vcvt.s32.f32 %v108
    %v112 = vcvt.s32.f32 %v109
    %v113 = vcvt.s32.f32 %v110
    %s114 = sadd.s32 0, 0
    %s115 = smul.u32 %s114, 20
    %v116 = vlaneseq
    %v117 = vshrl.u32 %v116, 7
    %v118 = vadd.s32 %v117, 8
    %v119 = vadd.s32 %v117, 16
    %v120 = vstv %s115
    %v121 = vadd.s32 %v120, %v117
    %v122 = vadd.s32 %v120, %v118
    %v123 = vadd.s32 %v120, %v119
    %vm124 = vcmp.ge.s32.totalorder %v121, 0
    %vm125 = vcmp.ge.s32.totalorder %v122, 0
    %vm126 = vcmp.ge.s32.totalorder %v123, 0
    %vm127 = vcmp.lt.s32.totalorder %v121, 16
    %vm128 = vcmp.lt.s32.totalorder %v122, 16
    %vm129 = vcmp.lt.s32.totalorder %v123, 16
    %vm130 = vmand %vm124, %vm127
    %vm131 = vmand %vm125, %vm128
    %vm132 = vmand %vm126, %vm129
    %v133 = vsel %vm130, 1, 0
    %v134 = vsel %vm131, 1, 0
    %v135 = vsel %vm132, 1, 0
    %vm136 = vcmp.eq.s32.totalorder %v133, 1
    %vm137 = vcmp.eq.s32.totalorder %v134, 1
    %vm138 = vcmp.eq.s32.totalorder %v135, 1
    %v139 = vsel %vm136, %v105, 0.0
    %v140 = vsel %vm137, %v106, 0.0
    %v141 = vsel %vm138, %v107, 0.0
    %v142 = vadd.f32 %v139, %v140
    %vm143 = vcmask 1043456
    %v144 = vsel %vm143, %v141, 0.0
    %v145 = vadd.f32 %v142, %v144
    %v146 = vrot.slane %v145, 4
    %v147 = vadd.f32 %v145, %v146
    %v148 = vrot.slane %v147, 2
    %v149 = vadd.f32 %v147, %v148
    %v150 = vrot.slane %v149, 1
    %v151 = vadd.f32 %v149, %v150
    %v152 = vsel %vm136, %v111, 0.0
    %v153 = vsel %vm137, %v112, 0.0
    %v154 = vsel %vm138, %v113, 0.0
    %v155 = vadd.f32 %v152, %v153
    %v156 = vsel %vm143, %v154, 0.0
    %v157 = vadd.f32 %v155, %v156
    %v158 = vrot.slane %v157, 4
    %v159 = vadd.f32 %v157, %v158
    %v160 = vrot.slane %v159, 2
    %v161 = vadd.f32 %v159, %v160
    %v162 = vrot.slane %v161, 1
    %v163 = vadd.f32 %v161, %v162
    %vm164 = vcmp.ge.s32.totalorder %v121, 16
    %vm165 = vcmp.ge.s32.totalorder %v122, 16
    %vm166 = vcmp.ge.s32.totalorder %v123, 16
    %vm167 = vcmp.lt.s32.totalorder %v121, 20
    %vm168 = vcmp.lt.s32.totalorder %v122, 20
    %vm169 = vcmp.lt.s32.totalorder %v123, 20
    %vm170 = vmand %vm164, %vm167
    %vm171 = vmand %vm165, %vm168
    %vm172 = vmand %vm166, %vm169
    %v173 = vsel %vm170, 1, 0
    %v174 = vsel %vm171, 1, 0
    %v175 = vsel %vm172, 1, 0
    %vm176 = vcmp.eq.s32.totalorder %v173, 1
    %vm177 = vcmp.eq.s32.totalorder %v174, 1
    %vm178 = vcmp.eq.s32.totalorder %v175, 1
    %v179 = vsel %vm176, %v105, 0.0
    %v180 = vsel %vm177, %v106, 0.0
    %v181 = vsel %vm178, %v107, 0.0
    %v182 = vadd.f32 %v179, %v180
    %v183 = vsel %vm143, %v181, 0.0
    %v184 = vadd.f32 %v182, %v183
    %v185 = vrot.slane %v184, 4
    %v186 = vadd.f32 %v184, %v185
    %v187 = vrot.slane %v186, 2
    %v188 = vadd.f32 %v186, %v187
    %v189 = vrot.slane %v188, 1
    %v190 = vadd.f32 %v188, %v189
    %v191 = vsel %vm176, %v111, 0.0
    %v192 = vsel %vm177, %v112, 0.0
    %v193 = vsel %vm178, %v113, 0.0
    %v194 = vadd.f32 %v191, %v192
    %v195 = vsel %vm143, %v193, 0.0
    %v196 = vadd.f32 %v194, %v195
    %v197 = vrot.slane %v196, 4
    %v198 = vadd.f32 %v196, %v197
    %v199 = vrot.slane %v198, 2
    %v200 = vadd.f32 %v198, %v199
    %v201 = vrot.slane %v200, 1
    %v202 = vadd.f32 %v200, %v201
    %v203 = vld [vmem:[#allocation7] sm:$0x3]
    %vm204 = vcmask 1040384
    %v205 = vsel %vm204, %v151, %v190
    %v206 = vadd.f32 %v203, %v205
    %207 = vst [vmem:[#allocation7] sm:$0x3] %v206
    %v208 = vld [vmem:[#allocation8] sm:$0x3]
    %v209 = vsel %vm204, %v163, %v202
    %v210 = vcvt.f32.s32.to.zero.pseudo %v209
    %v211 = vadd.s32 %v208, %v210
    %212 = vst [vmem:[#allocation8] sm:$0x3] %v211
    // Predicated region
    $region22: #{tpu_custom_call.1} parent=1 // pred_check
      _
    $region23: #{tpu_custom_call.1} parent=1 // pred_check_branch
      %214 = sbr.rel (0) target = $region25
    $region24: #{tpu_custom_call.1} parent=1 // pred_region
      %s216 = ssub.s32 32, 32
      %217 = vsyncadd [#allocation4], %s216
      %s219 = sshll.u32 [#allocation7], 4
      %s220 = int_to_ptr.vmem [resolvable:$true] %s219
      %222 = dma.vmem_to_hbm [thread:$0]  %s220, 32, %s2, [#allocation4]
    $region25: #{tpu_custom_call.1} parent=1 // pred_fallthru
      _
    // Predicated region
    $region26: #{tpu_custom_call.1} parent=1 // pred_check
      _
    $region27: #{tpu_custom_call.1} parent=1 // pred_check_branch
      %224 = sbr.rel (0) target = $region29
    $region28: #{tpu_custom_call.1} parent=1 // pred_region
      %s226 = ssub.s32 32, 32
      %227 = vsyncadd [#allocation9], %s226
      %s229 = sshll.u32 [#allocation8], 4
      %s230 = int_to_ptr.vmem [resolvable:$true] %s229
      %232 = dma.vmem_to_hbm [thread:$0]  %s230, 32, %s3, [#allocation9]
    $region29: #{tpu_custom_call.1} parent=1 // pred_fallthru
      _
    // Predicated region
    $region30: #{tpu_custom_call.1} parent=1 // pred_check
      _
    $region31: #{tpu_custom_call.1} parent=1 // pred_check_branch
      %234 = sbr.rel (0) target = $region33
    $region32: #{tpu_custom_call.1} parent=1 // pred_region
      %235 = dma.done [#allocation4], 32
    $region33: #{tpu_custom_call.1} parent=1 // pred_fallthru
      _
    // Predicated region
    $region34: #{tpu_custom_call.1} parent=1 // pred_check
      _
    $region35: #{tpu_custom_call.1} parent=1 // pred_check_branch
      %237 = sbr.rel (0) target = $region37
    $region36: #{tpu_custom_call.1} parent=1 // pred_region
      %238 = dma.done [#allocation9], 32
    $region37: #{tpu_custom_call.1} parent=1 // pred_fallthru
      _
    %239 = vsyncpa [#allocation3], 1
    %240 = vsyncpa [#allocation6], 1
    %241 = vsyncpa [#allocation4], 1
    %242 = vsyncpa [#allocation9], 1

</llo_original>
